<compile_context>
chip_gen: v7x
topology: tpu7x:2x2x1
jax: 0.10.0
libtpu: 0.0.40
codegen_flags: <defaults>
</compile_context>

<pallas_src>
import functools
import math

import jax
import jax.numpy as jnp
from jax.experimental import pallas as pl
from jax.experimental.pallas import tpu as pltpu


# ----------------------------------------------------------------------------
# Kernels
# ----------------------------------------------------------------------------
def _mc_epilogue(logits, o_ref, exp_dtype):
    """Numerically stable log_softmax of `logits` into o_ref.

    Padded class columns carry a -1e30 bias, so exp() underflows to 0 and
    they do not pollute the row sum."""
    m = jnp.max(logits, axis=-1, keepdims=True)
    shifted = logits - m
    if o_ref.dtype == jnp.float32:
        # Stage `shifted` in the output tile to cap live (tm, Cp) f32 temps.
        o_ref[...] = shifted
        p = jnp.exp(o_ref[...].astype(exp_dtype))
        lse = jnp.log(jnp.sum(p.astype(jnp.float32), axis=-1, keepdims=True))
        o_ref[...] = o_ref[...] - lse
    else:
        p = jnp.exp(shifted.astype(exp_dtype))
        lse = jnp.log(jnp.sum(p.astype(jnp.float32), axis=-1, keepdims=True))
        o_ref[...] = (shifted - lse).astype(o_ref.dtype)


def _mc_kernel(x_ref, w_ref, b_ref, o_ref, *, compute_dtype, exp_dtype):
    # x_ref: (tm, H) f32; w_ref: (H, Cp) compute_dtype; b_ref: (1, Cp) f32.
    logits = jnp.dot(x_ref[...].astype(compute_dtype), w_ref[...],
                     preferred_element_type=jnp.float32) + b_ref[...]
    _mc_epilogue(logits, o_ref, exp_dtype)


def _mc_kernel_ksplit(x_ref, w_ref, b_ref, o_ref, acc_ref, *,
                      compute_dtype, exp_dtype):
    # Hidden dim split across grid axis 1; f32 accumulator persists across k.
    @pl.when(pl.program_id(1) == 0)
    def _():
        acc_ref[...] = jnp.zeros_like(acc_ref)

    acc_ref[...] += jnp.dot(x_ref[...].astype(compute_dtype), w_ref[...],
                            preferred_element_type=jnp.float32)

    @pl.when(pl.program_id(1) == pl.num_programs(1) - 1)
    def _():
        _mc_epilogue(acc_ref[...] + b_ref[...], o_ref, exp_dtype)


# ----------------------------------------------------------------------------
# Wrapper
# ----------------------------------------------------------------------------
def _round_up(x, m):
    return ((x + m - 1) // m) * m


def _chip_info():
    """Returns (vmem_capacity_bytes, has_bf16_eup) with conservative fallbacks
    (64 MiB = v7x per-core VMEM; f32 exp unless we can prove bf16 EUP)."""
    vmem_bytes = 64 * 1024 * 1024
    try:
        vmem_bytes = int(pltpu.get_tpu_info().vmem_capacity_bytes)
    except Exception:
        pass
    bf16_eup = False
    try:
        kind = jax.devices()[0].device_kind.lower()
        bf16_eup = not any(s in kind for s in ("v2", "v3", "v4", "v5"))
    except Exception:
        pass
    return vmem_bytes, bf16_eup


def multi_classifier_forward(features, weight, bias, *, tile_m=512,
                             compute_dtype=jnp.bfloat16,
                             out_dtype=jnp.float32,
                             exp_dtype=None,
                             return_padded=False):
    """features: [N, H]; weight: [H, C]; bias: [C].
    Returns log_softmax(features @ weight + bias, axis=-1) as out_dtype [N, C]
    (or the padded [Np, Cp] array when return_padded=True; valid region is
    [:N, :C])."""
    N, H = features.shape
    H2, C = weight.shape
    assert H == H2, "weight must be [n_hidden, n_classes]"
    assert bias.shape == (C,)

    LANE, SUB = 128, 8
    Cp = _round_up(C, LANE)

    vmem_bytes, bf16_eup = _chip_info()
    if exp_dtype is None:
        # Small-H classifiers are EUP-bound, not MXU-bound, on v6e/v7x.
        exp_dtype = jnp.bfloat16 if (bf16_eup and H <= 256) else jnp.float32

    in_bytes = jnp.dtype(compute_dtype).itemsize
    out_bytes = jnp.dtype(out_dtype).itemsize

    # --- Lane-dense class padding: zero weight columns, -1e30 bias on pads.
    if Cp != C:
        weight_p = jnp.zeros((H, Cp), weight.dtype).at[:, :C].set(weight)
        bias_p = jnp.full((Cp,), -1e30, jnp.float32).at[:C].set(
            bias.astype(jnp.float32))
    else:
        weight_p = weight
        bias_p = bias.astype(jnp.float32)
    w = weight_p.astype(compute_dtype)          # one-time cast of the params
    b2 = bias_p.reshape(1, Cp)
    x = features.astype(jnp.float32)            # f32 in HBM; cast in-kernel

    # --- Generation-aware working-set budget (~96 MiB v5e/v6e, ~48 MiB v7x).
    budget = max(32 << 20, min(96 << 20, (vmem_bytes * 3) // 4))
    weight_resident = H * Cp * in_bytes + Cp * 4          # single-buffered

    def per_tile_bytes(t):
        return (2 * t * H * 4              # f32 feature tile (double-buffered)
                + t * H * in_bytes         # in-kernel bf16 cast of the tile
                + 2 * t * Cp * out_bytes   # output tile (double-buffered)
                + 2 * t * Cp * 4)          # logits + one live epilogue temp

    # --- M tile: multiple of 8, <= padded batch, and >= 2 grid steps when
    #     the batch allows so both v7x TensorCores get work.
    n_min = _round_up(N, SUB)
    tm = max(SUB, (int(tile_m) // SUB) * SUB)
    tm = min(tm, n_min)
    if n_min >= 2 * SUB:
        tm = min(tm, max(SUB, ((n_min // 2) // SUB) * SUB))

    use_ksplit = weight_resident + per_tile_bytes(SUB) > budget

    kernel_kwargs = dict(compute_dtype=compute_dtype, exp_dtype=exp_dtype)
    cost = pl.CostEstimate(
        flops=2 * N * H * Cp,
        transcendentals=N * Cp + N,          # exp per element + log per row
        bytes_accessed=N * H * 4 + H * Cp * in_bytes + N * Cp * out_bytes,
    )

    if not use_ksplit:
        while tm > SUB and weight_resident + per_tile_bytes(tm) > budget:
            tm = max(SUB, ((tm // 2) // SUB) * SUB)

        Np = _round_up(N, tm)
        if Np != N:
            x = jnp.zeros((Np, H), jnp.float32).at[:N, :].set(x)
        grid = (Np // tm,)

        need = weight_resident + per_tile_bytes(tm) + (4 << 20)
        vmem_limit = int(min(max(need, 32 << 20), vmem_bytes - (4 << 20)))

        def build(single_buffer_params):
            if single_buffer_params:
                # Constant index_map -> DMA'd once; one VMEM copy is enough.
                w_spec = pl.BlockSpec((H, Cp), lambda i: (0, 0),
                                      pipeline_mode=pl.Buffered(1))
                b_spec = pl.BlockSpec((1, Cp), lambda i: (0, 0),
                                      pipeline_mode=pl.Buffered(1))
            else:
                w_spec = pl.BlockSpec((H, Cp), lambda i: (0, 0))
                b_spec = pl.BlockSpec((1, Cp), lambda i: (0, 0))
            return pl.pallas_call(
                functools.partial(_mc_kernel, **kernel_kwargs),
                out_shape=jax.ShapeDtypeStruct((Np, Cp), out_dtype),
                grid_spec=pl.GridSpec(
                    grid=grid,
                    in_specs=[
                        pl.BlockSpec((tm, H), lambda i: (i, 0)),  # features
                        w_spec,                                   # weight
                        b_spec,                                   # bias
                    ],
                    out_specs=pl.BlockSpec((tm, Cp), lambda i: (i, 0)),
                ),
                compiler_params=pltpu.CompilerParams(
                    dimension_semantics=("parallel",),
                    vmem_limit_bytes=vmem_limit),
                cost_estimate=cost)

        try:
            out_padded = build(True)(x, w, b2)
        except Exception:
            # Fallback if this JAX build rejects Buffered(1) on a BlockSpec.
            out_padded = build(False)(x, w, b2)
    else:
        # --- K-split path: weight alone does not fit the budget, so stream
        #     (tk, Cp) weight slabs and accumulate logits in VMEM f32.
        tk = min(512, _round_up(H, LANE))

        def ksplit_bytes(t_m, t_k):
            return (2 * t_k * Cp * in_bytes      # weight tiles (dbl-buffered)
                    + 2 * t_m * t_k * 4          # f32 feature tiles
                    + t_m * t_k * in_bytes       # in-kernel cast
                    + 2 * t_m * Cp * out_bytes   # output tiles
                    + t_m * Cp * 4               # f32 accumulator
                    + 2 * t_m * Cp * 4           # epilogue temps
                    + Cp * 4)                    # bias

        while tk > LANE and ksplit_bytes(tm, tk) > budget:
            tk = max(LANE, ((tk // 2) // LANE) * LANE)
        while tm > SUB and ksplit_bytes(tm, tk) > budget:
            tm = max(SUB, ((tm // 2) // SUB) * SUB)

        Hp = _round_up(H, tk)
        Np = _round_up(N, tm)
        if Hp != H or Np != N:
            x = jnp.zeros((Np, Hp), jnp.float32).at[:N, :H].set(x)
        if Hp != H:
            w = jnp.zeros((Hp, Cp), compute_dtype).at[:H, :].set(w)
        grid = (Np // tm, Hp // tk)

        need = ksplit_bytes(tm, tk) + (4 << 20)
        vmem_limit = int(min(max(need, 32 << 20), vmem_bytes - (4 << 20)))

        out_padded = pl.pallas_call(
            functools.partial(_mc_kernel_ksplit, **kernel_kwargs),
            out_shape=jax.ShapeDtypeStruct((Np, Cp), out_dtype),
            grid_spec=pl.GridSpec(
                grid=grid,
                in_specs=[
                    pl.BlockSpec((tm, tk), lambda i, k: (i, k)),  # features
                    pl.BlockSpec((tk, Cp), lambda i, k: (k, 0)),  # weight slab
                    pl.BlockSpec((1, Cp), lambda i, k: (0, 0)),   # bias
                ],
                out_specs=pl.BlockSpec((tm, Cp), lambda i, k: (i, 0)),
                scratch_shapes=[pltpu.VMEM((tm, Cp), jnp.float32)],
            ),
            compiler_params=pltpu.CompilerParams(
                dimension_semantics=("parallel", "arbitrary"),
                vmem_limit_bytes=vmem_limit),
            cost_estimate=cost)(x, w, b2)

    if return_padded:
        return out_padded                 # valid region is [:N, :C]
    if out_padded.shape != (N, C):
        out_padded = out_padded[:N, :C]
    return out_padded


def init_params(key, n_hidden, n_classes):
    """Mirror nn.Linear.reset_parameters(): U(-1/sqrt(fan_in), 1/sqrt(fan_in)).
    Weight stored transposed relative to PyTorch: [n_hidden, n_classes]."""
    kw, kb = jax.random.split(key)
    bound = 1.0 / math.sqrt(n_hidden)
    weight = jax.random.uniform(
        kw, (n_hidden, n_classes), minval=-bound, maxval=bound,
        dtype=jnp.float32)
    bias = jax.random.uniform(
        kb, (n_classes,), minval=-bound, maxval=bound, dtype=jnp.float32)
    return weight, bias


if __name__ == "__main__":
    key = jax.random.PRNGKey(0)
    k_feat, k_params = jax.random.split(key)

    n_hidden, n_classes, batch = 32, 16, 16
    features = jax.random.normal(k_feat, (batch, n_hidden), dtype=jnp.float32)
    weight, bias = init_params(k_params, n_hidden, n_classes)

    ref = jax.nn.log_softmax(
        jnp.dot(features.astype(jnp.bfloat16), weight.astype(jnp.bfloat16),
                preferred_element_type=jnp.float32) + bias,
        axis=-1,
    )

    # Default (auto) config: may use the bf16-exp fast path on v6e/v7x.
    out = multi_classifier_forward(features, weight, bias)
    out = jax.block_until_ready(out)
    assert out.shape == (batch, n_classes)
    assert bool(jnp.all(jnp.isfinite(out)))
    assert jnp.allclose(out, ref, atol=2e-2, rtol=2e-2), "mismatch (auto path)"

    # f32-exp path, tight tolerance against the reference.
    out_f32 = multi_classifier_forward(features, weight, bias,
                                       exp_dtype=jnp.float32)
    out_f32 = jax.block_until_ready(out_f32)
    assert jnp.allclose(out_f32, ref, atol=5e-3, rtol=5e-3), \
        "mismatch (f32-exp path)"

    print("KERNEL_OK")
</pallas_src>

<mosaic_0001>
module attributes {stable_mosaic.version = 11 : i64} {
  func.func @_mc_kernel(%arg0: i32, %arg1: memref<8x32xf32, #tpu.memory_space<vmem>>, %arg2: memref<32x128xbf16, #tpu.memory_space<vmem>>, %arg3: memref<1x128xf32, #tpu.memory_space<vmem>>, %arg4: memref<8x128xf32, #tpu.memory_space<vmem>>) attributes {dimension_semantics = [#tpu.dimension_semantics<parallel>], iteration_bounds = array<i64: 2>, scalar_prefetch = 0 : i64, scratch_operands = 0 : i64, tpu.core_type = #tpu.core_type<tc>, window_params = [{transform_indices = @transform_0, window_bounds = array<i64: 8, 32>}, {pipeline_mode = #tpu.pipeline_mode<synchronous>, transform_indices = @transform_1, window_bounds = array<i64: 32, 128>}, {pipeline_mode = #tpu.pipeline_mode<synchronous>, transform_indices = @transform_2, window_bounds = array<i64: 1, 128>}, {transform_indices = @transform_3, window_bounds = array<i64: 8, 128>}]} {
    %c0 = arith.constant 0 : index
    %c0_0 = arith.constant 0 : index
    %0 = vector.load %arg1[%c0, %c0_0] : memref<8x32xf32, #tpu.memory_space<vmem>>, vector<8x32xf32>
    %1 = arith.truncf %0 : vector<8x32xf32> to vector<8x32xbf16>
    %c0_1 = arith.constant 0 : index
    %c0_2 = arith.constant 0 : index
    %2 = vector.load %arg2[%c0_1, %c0_2] : memref<32x128xbf16, #tpu.memory_space<vmem>>, vector<32x128xbf16>
    %cst = arith.constant dense<0.000000e+00> : vector<8x128xf32>
    %3 = tpu.matmul %1, %2, %cst {dimension_numbers = #tpu.dot_dimension_numbers<[1], [0], [0], [1], [0, 0, 1, 1], [], []>} : vector<8x32xbf16>, vector<32x128xbf16>, vector<8x128xf32> -> vector<8x128xf32>
    %c0_3 = arith.constant 0 : index
    %c0_4 = arith.constant 0 : index
    %4 = vector.load %arg3[%c0_3, %c0_4] : memref<1x128xf32, #tpu.memory_space<vmem>>, vector<1x128xf32>
    %5 = vector.broadcast %4 : vector<1x128xf32> to vector<8x128xf32>
    %6 = arith.addf %3, %5 : vector<8x128xf32>
    %cst_5 = arith.constant dense<0xFF800000> : vector<8xf32>
    %7 = vector.multi_reduction <maximumf>, %6, %cst_5 [1] : vector<8x128xf32> to vector<8xf32>
    %8 = vector.shape_cast %7 : vector<8xf32> to vector<8x1xf32>
    %9 = vector.broadcast %8 : vector<8x1xf32> to vector<8x128xf32>
    %10 = arith.subf %6, %9 : vector<8x128xf32>
    %c0_6 = arith.constant 0 : index
    %c0_7 = arith.constant 0 : index
    %11 = vector.load %arg4[%c0_6, %c0_7] : memref<8x128xf32, #tpu.memory_space<vmem>>, vector<8x128xf32>
    tpu.vector_store %arg4[%c0_6, %c0_7], %10 {strides = array<i32>} : memref<8x128xf32, #tpu.memory_space<vmem>>, vector<8x128xf32>,
    %c0_8 = arith.constant 0 : index
    %c0_9 = arith.constant 0 : index
    %12 = vector.load %arg4[%c0_8, %c0_9] : memref<8x128xf32, #tpu.memory_space<vmem>>, vector<8x128xf32>
    %13 = arith.truncf %12 : vector<8x128xf32> to vector<8x128xbf16>
    %14 = math.exp %13 : vector<8x128xbf16>
    %15 = arith.extf %14 : vector<8x128xbf16> to vector<8x128xf32>
    %cst_10 = arith.constant dense<0.000000e+00> : vector<8xf32>
    %16 = vector.multi_reduction <add>, %15, %cst_10 [1] : vector<8x128xf32> to vector<8xf32>
    %17 = vector.shape_cast %16 : vector<8xf32> to vector<8x1xf32>
    %18 = math.log %17 : vector<8x1xf32>
    %c0_11 = arith.constant 0 : index
    %c0_12 = arith.constant 0 : index
    %19 = vector.load %arg4[%c0_11, %c0_12] : memref<8x128xf32, #tpu.memory_space<vmem>>, vector<8x128xf32>
    %20 = vector.broadcast %18 : vector<8x1xf32> to vector<8x128xf32>
    %21 = arith.subf %19, %20 : vector<8x128xf32>
    %c0_13 = arith.constant 0 : index
    %c0_14 = arith.constant 0 : index
    %22 = vector.load %arg4[%c0_13, %c0_14] : memref<8x128xf32, #tpu.memory_space<vmem>>, vector<8x128xf32>
    tpu.vector_store %arg4[%c0_13, %c0_14], %21 {strides = array<i32>} : memref<8x128xf32, #tpu.memory_space<vmem>>, vector<8x128xf32>,
    return
  }
  func.func @transform_0(%arg0: i32) -> (i32, i32) {
    %c0_i32 = arith.constant 0 : i32
    %c0_i32_0 = arith.constant 0 : i32
    return %arg0, %c0_i32 : i32, i32
  }
  func.func @transform_1(%arg0: i32) -> (i32, i32) {
    %c0_i32 = arith.constant 0 : i32
    %c0_i32_0 = arith.constant 0 : i32
    %c0_i32_1 = arith.constant 0 : i32
    return %c0_i32, %c0_i32_0 : i32, i32
  }
  func.func @transform_2(%arg0: i32) -> (i32, i32) {
    %c0_i32 = arith.constant 0 : i32
    %c0_i32_0 = arith.constant 0 : i32
    %c0_i32_1 = arith.constant 0 : i32
    return %c0_i32, %c0_i32_0 : i32, i32
  }
  func.func @transform_3(%arg0: i32) -> (i32, i32) {
    %c0_i32 = arith.constant 0 : i32
    %c0_i32_0 = arith.constant 0 : i32
    return %arg0, %c0_i32 : i32, i32
  }
}

module attributes {stable_mosaic.version = 11 : i64} {
  func.func @_mc_kernel(%arg0: i32, %arg1: memref<8x32xf32, #tpu.memory_space<vmem>>, %arg2: memref<32x128xbf16, #tpu.memory_space<vmem>>, %arg3: memref<1x128xf32, #tpu.memory_space<vmem>>, %arg4: memref<8x128xf32, #tpu.memory_space<vmem>>) attributes {dimension_semantics = [#tpu.dimension_semantics<parallel>], iteration_bounds = array<i64: 2>, scalar_prefetch = 0 : i64, scratch_operands = 0 : i64, tpu.core_type = #tpu.core_type<tc>, window_params = [{transform_indices = @transform_0, window_bounds = array<i64: 8, 32>}, {pipeline_mode = #tpu.pipeline_mode<synchronous>, transform_indices = @transform_1, window_bounds = array<i64: 32, 128>}, {pipeline_mode = #tpu.pipeline_mode<synchronous>, transform_indices = @transform_2, window_bounds = array<i64: 1, 128>}, {transform_indices = @transform_3, window_bounds = array<i64: 8, 128>}]} {
    %c0 = arith.constant 0 : index
    %c0_0 = arith.constant 0 : index
    %0 = vector.load %arg1[%c0, %c0_0] : memref<8x32xf32, #tpu.memory_space<vmem>>, vector<8x32xf32>
    %1 = arith.truncf %0 : vector<8x32xf32> to vector<8x32xbf16>
    %c0_1 = arith.constant 0 : index
    %c0_2 = arith.constant 0 : index
    %2 = vector.load %arg2[%c0_1, %c0_2] : memref<32x128xbf16, #tpu.memory_space<vmem>>, vector<32x128xbf16>
    %cst = arith.constant dense<0.000000e+00> : vector<8x128xf32>
    %3 = tpu.matmul %1, %2, %cst {dimension_numbers = #tpu.dot_dimension_numbers<[1], [0], [0], [1], [0, 0, 1, 1], [], []>} : vector<8x32xbf16>, vector<32x128xbf16>, vector<8x128xf32> -> vector<8x128xf32>
    %c0_3 = arith.constant 0 : index
    %c0_4 = arith.constant 0 : index
    %4 = vector.load %arg3[%c0_3, %c0_4] : memref<1x128xf32, #tpu.memory_space<vmem>>, vector<1x128xf32>
    %5 = vector.broadcast %4 : vector<1x128xf32> to vector<8x128xf32>
    %6 = arith.addf %3, %5 : vector<8x128xf32>
    %cst_5 = arith.constant dense<0xFF800000> : vector<8xf32>
    %7 = vector.multi_reduction <maximumf>, %6, %cst_5 [1] : vector<8x128xf32> to vector<8xf32>
    %8 = vector.shape_cast %7 : vector<8xf32> to vector<8x1xf32>
    %9 = vector.broadcast %8 : vector<8x1xf32> to vector<8x128xf32>
    %10 = arith.subf %6, %9 : vector<8x128xf32>
    %c0_6 = arith.constant 0 : index
    %c0_7 = arith.constant 0 : index
    %11 = vector.load %arg4[%c0_6, %c0_7] : memref<8x128xf32, #tpu.memory_space<vmem>>, vector<8x128xf32>
    tpu.vector_store %arg4[%c0_6, %c0_7], %10 {strides = array<i32>} : memref<8x128xf32, #tpu.memory_space<vmem>>, vector<8x128xf32>,
    %c0_8 = arith.constant 0 : index
    %c0_9 = arith.constant 0 : index
    %12 = vector.load %arg4[%c0_8, %c0_9] : memref<8x128xf32, #tpu.memory_space<vmem>>, vector<8x128xf32>
    %13 = arith.truncf %12 : vector<8x128xf32> to vector<8x128xbf16>
    %14 = math.exp %13 : vector<8x128xbf16>
    %15 = arith.extf %14 : vector<8x128xbf16> to vector<8x128xf32>
    %cst_10 = arith.constant dense<0.000000e+00> : vector<8xf32>
    %16 = vector.multi_reduction <add>, %15, %cst_10 [1] : vector<8x128xf32> to vector<8xf32>
    %17 = vector.shape_cast %16 : vector<8xf32> to vector<8x1xf32>
    %18 = math.log %17 : vector<8x1xf32>
    %c0_11 = arith.constant 0 : index
    %c0_12 = arith.constant 0 : index
    %19 = vector.load %arg4[%c0_11, %c0_12] : memref<8x128xf32, #tpu.memory_space<vmem>>, vector<8x128xf32>
    %20 = vector.broadcast %18 : vector<8x1xf32> to vector<8x128xf32>
    %21 = arith.subf %19, %20 : vector<8x128xf32>
    %c0_13 = arith.constant 0 : index
    %c0_14 = arith.constant 0 : index
    %22 = vector.load %arg4[%c0_13, %c0_14] : memref<8x128xf32, #tpu.memory_space<vmem>>, vector<8x128xf32>
    tpu.vector_store %arg4[%c0_13, %c0_14], %21 {strides = array<i32>} : memref<8x128xf32, #tpu.memory_space<vmem>>, vector<8x128xf32>,
    return
  }
  func.func @transform_0(%arg0: i32) -> (i32, i32) {
    %c0_i32 = arith.constant 0 : i32
    %c0_i32_0 = arith.constant 0 : i32
    return %arg0, %c0_i32 : i32, i32
  }
  func.func @transform_1(%arg0: i32) -> (i32, i32) {
    %c0_i32 = arith.constant 0 : i32
    %c0_i32_0 = arith.constant 0 : i32
    %c0_i32_1 = arith.constant 0 : i32
    return %c0_i32, %c0_i32_0 : i32, i32
  }
  func.func @transform_2(%arg0: i32) -> (i32, i32) {
    %c0_i32 = arith.constant 0 : i32
    %c0_i32_0 = arith.constant 0 : i32
    %c0_i32_1 = arith.constant 0 : i32
    return %c0_i32, %c0_i32_0 : i32, i32
  }
  func.func @transform_3(%arg0: i32) -> (i32, i32) {
    %c0_i32 = arith.constant 0 : i32
    %c0_i32_0 = arith.constant 0 : i32
    return %arg0, %c0_i32 : i32, i32
  }
}

</mosaic_0001>

<llo_original>
// kernel: tpu_custom_call.1
$region0: #{tpu_custom_call.1}
  #allocation0 [shape = 'u32[]', space=smem, size = 0x4, offset = 0x4, fixed_abs, tag = 'smem constant byte address 0x4 - core index']
  #allocation1 [shape = 'u32[144,128]{1,0:T(1,128)}', space=vmem, size = 0x12000, scoped, tag = 'internal scratch']
  %s0 = inlined_call_operand.hbm [shape: f32[16,32], index: 0, kind: input, shape index: {}]
  %s1 = inlined_call_operand.hbm [shape: bf16[32,128], index: 1, kind: input, shape index: {}]
  %s2 = inlined_call_operand.vmem [shape: f32[1,128], index: 2, kind: input, shape index: {}]
  %s3 = inlined_call_operand.hbm [shape: f32[16,128], index: 3, kind: output, shape index: {}]
  %s4 = sld [smem:[#allocation0]]
  $region53: #{tpu_custom_call.1} parent=0
    _
  %s6 = ssub.s32 1, %s4
  %s7 = scalar_select 0, %s6, %s4
  $region1: #{tpu_custom_call.1} parent=0
    #allocation2 [shape = 'u8[8192]{0}', space=vmem, size = 0x2000, scoped, tag = 'input window, operand 0']
    #allocation3 [shape = 's32[2]{0}', space=sflag, size = 0x8, scoped, tag = 'scoped memory for tpu_custom_call.1']
    #allocation4 [shape = 's32[2]{0}', space=sflag, size = 0x8, scoped, tag = 'scoped memory for tpu_custom_call.1']
    #allocation5 [shape = 'u8[8192]{0}', space=vmem, size = 0x2000, scoped, tag = 'input window, operand 1, single buffered']
    #allocation6 [shape = 's32[1]{0}', space=sflag, size = 0x4, scoped, tag = 'scoped memory for tpu_custom_call.1']
    #allocation7 [shape = 'u8[8192]{0}', space=vmem, size = 0x2000, scoped, tag = 'output window, operand 0']
    %8 = vsyncpa [#allocation3], 0
    %s9 = scalar_lea.sflag [#allocation3], 1
    %10 = vsyncpa %s9, 0
    %11 = vsyncpa [#allocation6], 0
    %12 = vsyncpa [#allocation4], 0
    %s13 = scalar_lea.sflag [#allocation4], 1
    %14 = vsyncpa %s13, 0
    loop: start=0, step=1, limit=4
    $region2: #{tpu_custom_call.1} parent=1 // loop_pre_header
      _
    $region3: #{tpu_custom_call.1} parent=1 // loop_header
      %s16 = sphi 0, %s20
      %p17 = scmp.ge.s32.totalorder %s16, 4
      %s26 = sphi 0, %s28
      %s29 = sphi 0, %s26
      %s30 = sphi 0, %s29
      %s46 = sphi 0, %s30
      %s50 = sphi 0, %s50
      %s52 = sphi 0, %s50
      %s53 = sphi 0, %s52
      %s67 = sphi 0, %s53
      %s71 = sphi 0, %s71
      %s73 = sphi 0, %s71
      %s74 = sphi 0, %s73
      %s88 = sphi 0, %s74
      %s94 = sphi 0, %s96
      %s97 = sphi 0, %s94
      %s98 = sphi 0, %s97
      %s114 = sphi 0, %s98
    $region4: #{tpu_custom_call.1} parent=1 // loop_header_branch
      %19 = sbr.rel (%p17) target = $region8
    $region5: #{tpu_custom_call.1} parent=1 // loop_body
      %s21 = ssub.s32 %s16, 1
      %s22 = ssub.s32 %s16, 2
      %s23 = sadd.s32 %s16, 1
      %s24 = ssub.s32 %s16, %s23
      %p25 = scmp.eq.s32.totalorder %s24, 0
      %s27 = sadd.s32 %s26, 1
      %s28 = scalar_select %p25, %s26, %s27
      %p31 = pneg %p25
      %p32 = scmp.eq.s32.totalorder %s16, 1
      %p33 = por %p31, %p32
      %p34 = scmp.ne.s32.totalorder %s26, %s29
      %p35 = scmp.eq.s32.totalorder %s16, 0
      %p36 = por %p34, %p35
      %p37 = scmp.ne.s32.totalorder %s26, %s29
      %p38 = scmp.eq.s32.totalorder %s21, 1
      %p39 = por %p37, %p38
      %p40 = scmp.ne.s32.totalorder %s29, %s30
      %p41 = scmp.eq.s32.totalorder %s21, 0
      %p42 = por %p40, %p41
      %p43 = scmp.ne.s32.totalorder %s29, %s30
      %p44 = scmp.eq.s32.totalorder %s22, 1
      %p45 = por %p43, %p44
      %p47 = scmp.ne.s32.totalorder %s30, %s46
      %p48 = scmp.eq.s32.totalorder %s22, 0
      %p49 = por %p47, %p48
      %s51 = sadd.s32 %s50, 1
      %p54 = scmp.eq.s32.totalorder %s16, 1
      %p55 = scmp.ne.s32.totalorder %s50, %s52
      %p56 = scmp.eq.s32.totalorder %s16, 0
      %p57 = por %p55, %p56
      %p58 = scmp.ne.s32.totalorder %s50, %s52
      %p59 = scmp.eq.s32.totalorder %s21, 1
      %p60 = por %p58, %p59
      %p61 = scmp.ne.s32.totalorder %s52, %s53
      %p62 = scmp.eq.s32.totalorder %s21, 0
      %p63 = por %p61, %p62
      %p64 = scmp.ne.s32.totalorder %s52, %s53
      %p65 = scmp.eq.s32.totalorder %s22, 1
      %p66 = por %p64, %p65
      %p68 = scmp.ne.s32.totalorder %s53, %s67
      %p69 = scmp.eq.s32.totalorder %s22, 0
      %p70 = por %p68, %p69
      %s72 = sadd.s32 %s71, 1
      %p75 = scmp.eq.s32.totalorder %s16, 1
      %p76 = scmp.ne.s32.totalorder %s71, %s73
      %p77 = scmp.eq.s32.totalorder %s16, 0
      %p78 = por %p76, %p77
      %p79 = scmp.ne.s32.totalorder %s71, %s73
      %p80 = scmp.eq.s32.totalorder %s21, 1
      %p81 = por %p79, %p80
      %p82 = scmp.ne.s32.totalorder %s73, %s74
      %p83 = scmp.eq.s32.totalorder %s21, 0
      %p84 = por %p82, %p83
      %p85 = scmp.ne.s32.totalorder %s73, %s74
      %p86 = scmp.eq.s32.totalorder %s22, 1
      %p87 = por %p85, %p86
      %p89 = scmp.ne.s32.totalorder %s74, %s88
      %p90 = scmp.eq.s32.totalorder %s22, 0
      %p91 = por %p89, %p90
      %s92 = ssub.s32 %s16, %s23
      %p93 = scmp.eq.s32.totalorder %s92, 0
      %s95 = sadd.s32 %s94, 1
      %s96 = scalar_select %p93, %s94, %s95
      %p99 = pneg %p93
      %p100 = scmp.eq.s32.totalorder %s16, 1
      %p101 = por %p99, %p100
      %p102 = scmp.ne.s32.totalorder %s94, %s97
      %p103 = scmp.eq.s32.totalorder %s16, 0
      %p104 = por %p102, %p103
      %p105 = scmp.ne.s32.totalorder %s94, %s97
      %p106 = scmp.eq.s32.totalorder %s21, 1
      %p107 = por %p105, %p106
      %p108 = scmp.ne.s32.totalorder %s97, %s98
      %p109 = scmp.eq.s32.totalorder %s21, 0
      %p110 = por %p108, %p109
      %p111 = scmp.ne.s32.totalorder %s97, %s98
      %p112 = scmp.eq.s32.totalorder %s22, 1
      %p113 = por %p111, %p112
      %p115 = scmp.ne.s32.totalorder %s98, %s114
      %p116 = scmp.eq.s32.totalorder %s22, 0
      %p117 = por %p115, %p116
      %p118 = scmp.le.s32.totalorder 1, %s16
      %p119 = scmp.lt.s32.totalorder %s16, 3
      %p120 = pnand %p118, %p119
      %p121 = pneg %p120
      // Predicated region
      $region9: #{tpu_custom_call.1} parent=5 // pred_check
        _
      $region10: #{tpu_custom_call.1} parent=5 // pred_check_branch
        %123 = sbr.rel (%p120) target = $region12
      $region11: #{tpu_custom_call.1} parent=5 // pred_region
        %s124 = ssub.s32 %s16, 1
        // Predicated region
        $region13: #{tpu_custom_call.1} parent=11 // pred_check
          %p125 = pneg %p63
        $region14: #{tpu_custom_call.1} parent=11 // pred_check_branch
          %127 = sbr.rel (%p125) target = $region16
        $region15: #{tpu_custom_call.1} parent=11 // pred_region
          %s129 = ssub.s32 256, 256
          %130 = vsyncadd [#allocation6], %s129
          %s131 = sshll.u32 [#allocation5], 4
          %s132 = int_to_ptr.vmem [resolvable:$true] %s131
          %137 = dma.hbm_to_vmem [thread:$0]  %s1, 256, %s132, [#allocation6], 64, 64, 4
        $region16: #{tpu_custom_call.1} parent=11 // pred_fallthru
          _
        // Predicated region
        $region17: #{tpu_custom_call.1} parent=11 // pred_check
          %p138 = pneg %p84
        $region18: #{tpu_custom_call.1} parent=11 // pred_check_branch
          %140 = sbr.rel (%p138) target = $region20
        $region19: #{tpu_custom_call.1} parent=11 // pred_region
          _
        $region20: #{tpu_custom_call.1} parent=11 // pred_fallthru
          _
      $region12: #{tpu_custom_call.1} parent=5 // pred_fallthru
        _
      %p141 = scmp.lt.s32.totalorder %s16, 2
      // Predicated region
      $region21: #{tpu_custom_call.1} parent=5 // pred_check
        %p142 = pneg %p141
      $region22: #{tpu_custom_call.1} parent=5 // pred_check_branch
        %144 = sbr.rel (%p142) target = $region24
      $region23: #{tpu_custom_call.1} parent=5 // pred_region
        // Predicated region
        $region25: #{tpu_custom_call.1} parent=23 // pred_check
          %p145 = pneg %p36
        $region26: #{tpu_custom_call.1} parent=23 // pred_check_branch
          %147 = sbr.rel (%p145) target = $region28
        $region27: #{tpu_custom_call.1} parent=23 // pred_region
          %s148 = sand.u32 %s26, 1
          %s149 = scalar_lea.sflag [#allocation3], %s148
          %s150 = sand.u32 %s26, 1
          %s151 = smul.addr %s150, 8
          %s152 = scalar_lea.vmem [#allocation2], %s151
          %s154 = ssub.s32 128, 128
          %155 = vsyncadd %s149, %s154
          %s156 = smul.addr %s16, 128
          %s157 = scalar_lea.hbm %s0, %s156
          %s159 = sshll.u32 %s152, 4
          %s160 = int_to_ptr.vmem [resolvable:$true] %s159
          %162 = dma.hbm_to_vmem [thread:$0]  %s157, 128, %s160, %s149
        $region28: #{tpu_custom_call.1} parent=23 // pred_fallthru
          _
      $region24: #{tpu_custom_call.1} parent=5 // pred_fallthru
        _
      %p163 = scmp.le.s32.totalorder 1, %s16
      %p164 = scmp.lt.s32.totalorder %s16, 3
      %p165 = pnand %p163, %p164
      %p166 = pneg %p165
      // Predicated region
      $region29: #{tpu_custom_call.1} parent=5 // pred_check
        _
      $region30: #{tpu_custom_call.1} parent=5 // pred_check_branch
        %168 = sbr.rel (%p165) target = $region32
      $region31: #{tpu_custom_call.1} parent=5 // pred_region
        %s169 = ssub.s32 %s16, 1
        %s170 = sand.u32 %s29, 1
        %s171 = scalar_lea.sflag [#allocation3], %s170
        %s172 = sand.u32 %s29, 1
        %s173 = smul.addr %s172, 8
        %s174 = scalar_lea.vmem [#allocation2], %s173
        // Predicated region
        $region33: #{tpu_custom_call.1} parent=31 // pred_check
          %p175 = pneg %p42
        $region34: #{tpu_custom_call.1} parent=31 // pred_check_branch
          %177 = sbr.rel (%p175) target = $region36
        $region35: #{tpu_custom_call.1} parent=31 // pred_region
          %178 = dma.done %s171, 128
        $region36: #{tpu_custom_call.1} parent=31 // pred_fallthru
          _
        // Predicated region
        $region37: #{tpu_custom_call.1} parent=31 // pred_check
          %p179 = pneg %p63
        $region38: #{tpu_custom_call.1} parent=31 // pred_check_branch
          %181 = sbr.rel (%p179) target = $region40
        $region39: #{tpu_custom_call.1} parent=31 // pred_region
          %182 = dma.done [#allocation6], 256
        $region40: #{tpu_custom_call.1} parent=31 // pred_fallthru
          _
        %s183 = sand.u32 %s29, 1
        %s184 = scalar_lea.sflag [#allocation3], %s183
        %s185 = sand.u32 %s29, 1
        %s186 = smul.addr %s185, 8
        %s187 = scalar_lea.vmem [#allocation2], %s186
        %p188 = pneg %p42
        %p189 = pneg %p39
        %p190 = pneg %p63
        %p191 = pneg %p60
        %p192 = pneg %p84
        %p193 = pneg %p81
        %p194 = pneg %p110
        %p195 = pneg %p107
        %s196 = sand.u32 %s97, 1
        %s197 = scalar_lea.sflag [#allocation4], %s196
        %s198 = sand.u32 %s97, 1
        %s199 = smul.addr %s198, 8
        %s200 = scalar_lea.vmem [#allocation7], %s199
        %v202 = vld [vmem:[%s174] sm:$0xff]
        %v203 = vpack.c.bf16 %v202, %v202
        %v204 = vld [vmem:[#allocation5] sm:$0xf]
        %v205 = vld [vmem:[#allocation5 + $0x4] sm:$0xf]
        %v206 = vld [vmem:[#allocation5 + $0x8] sm:$0xf]
        %v207 = vld [vmem:[#allocation5 + $0xc] sm:$0xf]
        %v208 = vld [vmem:[%s2] sm:$0x1]
        %v210 = vlaneseq
        %v211 = vshrl.u32 %v210, 7
        %v212 = vsub.s32 0, %v211
        %v213 = vrot.slane %v208, %v212
        %v219 = vunpack.c.l.b16 %v204
        %v220 = vunpack.c.l.b16 %v205
        %v221 = vunpack.c.l.b16 %v206
        %v222 = vunpack.c.l.b16 %v207
        %v223 = vpack.c.b16 %v220, %v219
        %v224 = vpack.c.b16 %v222, %v221
        %vm227 = vcmask 261120
        %v229 = vsel %vm227, %v203, 0
        %231 = vmatprep.subr.bf16.mxu0 0
        %232 = vmatpush1.bf16.msra.mxu0 %v223
        %233 = vmatprep.subr.bf16.mxu0 0
        %234 = vmatpush1.bf16.msra.mxu0 %v224
        %235 = vmatprep.subr.bf16.mxu0 0
        %236 = vmatpush1.bf16.msra.mxu0 0
        %237 = vmatprep.subr.bf16.mxu0 0
        %238 = vmatpush1.bf16.msra.mxu0 0
        %239 = vmatprep.subr.bf16.mxu0 0
        %240 = vmatpush1.bf16.msra.mxu0 0
        %241 = vmatprep.subr.bf16.mxu0 0
        %242 = vmatpush1.bf16.msra.mxu0 0
        %243 = vmatprep.subr.bf16.mxu0 0
        %244 = vmatpush1.bf16.msra.mxu0 0
        %245 = vmatprep.subr.bf16.mxu0 0
        %246 = vmatpush1.bf16.msra.mxu0 0
        %247 = vmatprep.subr.bf16.mxu0 0
        %248 = vmatpush1.bf16.msra.mxu0 0
        %249 = vmatprep.subr.bf16.mxu0 0
        %250 = vmatpush1.bf16.msra.mxu0 0
        %251 = vmatprep.subr.bf16.mxu0 0
        %252 = vmatpush1.bf16.msra.mxu0 0
        %253 = vmatprep.subr.bf16.mxu0 0
        %254 = vmatpush1.bf16.msra.mxu0 0
        %255 = vmatprep.subr.bf16.mxu0 0
        %256 = vmatpush1.bf16.msra.mxu0 0
        %257 = vmatprep.subr.bf16.mxu0 0
        %258 = vmatpush1.bf16.msra.mxu0 0
        %259 = vmatprep.subr.bf16.mxu0 0
        %260 = vmatpush1.bf16.msra.mxu0 0
        %261 = vmatprep.subr.bf16.mxu0 0
        %262 = vmatpush1.bf16.msra.mxu0 0
        %263 = vmatprep.mubr.bf16.mxu0 0
        %264 = vmatmul.mubr.bf16.gmra.mrb[0].mxu0 %v229
        %v265 = vpop.f32.mrb[0].mxu0
        %v266 = vadd.f32 %v213, %v265
        %v267 = vpop.f32.mrb[0].mxu0
        %v268 = vpop.f32.mrb[0].mxu0
        %v269 = vpop.f32.mrb[0].mxu0
        %270 = vdwg.mxu0
        %271 = vmax.xlane.f32.xlu0 %v266
        %v272 = vpop.xlane.xlu0 %271
        %v273 = vsub.f32 %v266, %v272
        %274 = vst [vmem:[%s200] sm:$0xff] %v273
        %v275 = vld [vmem:[%s200] sm:$0xff]
        %v276 = vpack.c.bf16 %v275, %v275
        %v278 = vmul.bf16 %v276, 1069105081
        %v279 = vpow.bf16.pop %v278
        %v280 = vunpack.c.l.bf16 %v279
        %281 = vadd.xlane.f32.xlu0 %v280
        %v282 = vpop.xlane.xlu0 %281
        %v283 = vlog2.pop %v282
        %v284 = vmul.f32 %v283, 0.6931472
        %v285 = vsub.f32 %v275, %v284
        %286 = vst [vmem:[%s200] sm:$0xff] %v285
        %s287 = sand.u32 %s97, 1
        %s288 = scalar_lea.sflag [#allocation4], %s287
        %s289 = sand.u32 %s97, 1
        %s290 = smul.addr %s289, 8
        %s291 = scalar_lea.vmem [#allocation7], %s290
        // Predicated region
        $region41: #{tpu_custom_call.1} parent=31 // pred_check
          %p292 = pneg %p107
        $region42: #{tpu_custom_call.1} parent=31 // pred_check_branch
          %294 = sbr.rel (%p292) target = $region44
        $region43: #{tpu_custom_call.1} parent=31 // pred_region
          %s296 = ssub.s32 128, 128
          %297 = vsyncadd %s288, %s296
          %s298 = smul.addr %s21, 128
          %s299 = scalar_lea.hbm %s3, %s298
          %s301 = sshll.u32 %s291, 4
          %s302 = int_to_ptr.vmem [resolvable:$true] %s301
          %304 = dma.vmem_to_hbm [thread:$0]  %s302, 128, %s299, %s288
        $region44: #{tpu_custom_call.1} parent=31 // pred_fallthru
          _
      $region32: #{tpu_custom_call.1} parent=5 // pred_fallthru
        _
      %p305 = scmp.le.s32.totalorder 2, %s16
      // Predicated region
      $region45: #{tpu_custom_call.1} parent=5 // pred_check
        %p306 = pneg %p305
      $region46: #{tpu_custom_call.1} parent=5 // pred_check_branch
        %308 = sbr.rel (%p306) target = $region48
      $region47: #{tpu_custom_call.1} parent=5 // pred_region
        %s309 = ssub.s32 %s16, 2
        // Predicated region
        $region49: #{tpu_custom_call.1} parent=47 // pred_check
          %p310 = pneg %p113
        $region50: #{tpu_custom_call.1} parent=47 // pred_check_branch
          %312 = sbr.rel (%p310) target = $region52
        $region51: #{tpu_custom_call.1} parent=47 // pred_region
          %s313 = sand.u32 %s98, 1
          %s314 = scalar_lea.sflag [#allocation4], %s313
          %s315 = sand.u32 %s98, 1
          %s316 = smul.addr %s315, 8
          %s317 = scalar_lea.vmem [#allocation7], %s316
          %318 = dma.done %s314, 128
        $region52: #{tpu_custom_call.1} parent=47 // pred_fallthru
          _
      $region48: #{tpu_custom_call.1} parent=5 // pred_fallthru
        _
    $region6: #{tpu_custom_call.1} parent=1 // loop_footer
      %s20 = sadd.s32 1, %s16
    $region7: #{tpu_custom_call.1} parent=1 // loop_footer_branch
      %15 = sbr.rel target = $region3
    $region8: #{tpu_custom_call.1} parent=1 // loop_exit
      _
    %319 = vsyncpa [#allocation3], 1
    %s320 = scalar_lea.sflag [#allocation3], 1
    %321 = vsyncpa %s320, 1
    %322 = vsyncpa [#allocation6], 1
    %323 = vsyncpa [#allocation4], 1
    %s324 = scalar_lea.sflag [#allocation4], 1
    %325 = vsyncpa %s324, 1

// kernel: tpu_custom_call.1
$region0: #{tpu_custom_call.1}
  #allocation0 [shape = 'u32[]', space=smem, size = 0x4, offset = 0x4, fixed_abs, tag = 'smem constant byte address 0x4 - core index']
  #allocation1 [shape = 'u32[144,128]{1,0:T(1,128)}', space=vmem, size = 0x12000, scoped, tag = 'internal scratch']
  %s0 = inlined_call_operand.hbm [shape: f32[16,32], index: 0, kind: input, shape index: {}]
  %s1 = inlined_call_operand.hbm [shape: bf16[32,128], index: 1, kind: input, shape index: {}]
  %s2 = inlined_call_operand.vmem [shape: f32[1,128], index: 2, kind: input, shape index: {}]
  %s3 = inlined_call_operand.hbm [shape: f32[16,128], index: 3, kind: output, shape index: {}]
  %s4 = sld [smem:[#allocation0]]
  $region53: #{tpu_custom_call.1} parent=0
    _
  %s6 = ssub.s32 1, %s4
  %s7 = scalar_select 0, %s6, %s4
  $region1: #{tpu_custom_call.1} parent=0
    #allocation2 [shape = 'u8[8192]{0}', space=vmem, size = 0x2000, scoped, tag = 'input window, operand 0']
    #allocation3 [shape = 's32[2]{0}', space=sflag, size = 0x8, scoped, tag = 'scoped memory for tpu_custom_call.1']
    #allocation4 [shape = 's32[2]{0}', space=sflag, size = 0x8, scoped, tag = 'scoped memory for tpu_custom_call.1']
    #allocation5 [shape = 'u8[8192]{0}', space=vmem, size = 0x2000, scoped, tag = 'input window, operand 1, single buffered']
    #allocation6 [shape = 's32[1]{0}', space=sflag, size = 0x4, scoped, tag = 'scoped memory for tpu_custom_call.1']
    #allocation7 [shape = 'u8[8192]{0}', space=vmem, size = 0x2000, scoped, tag = 'output window, operand 0']
    %8 = vsyncpa [#allocation3], 0
    %s9 = scalar_lea.sflag [#allocation3], 1
    %10 = vsyncpa %s9, 0
    %11 = vsyncpa [#allocation6], 0
    %12 = vsyncpa [#allocation4], 0
    %s13 = scalar_lea.sflag [#allocation4], 1
    %14 = vsyncpa %s13, 0
    loop: start=0, step=1, limit=4
    $region2: #{tpu_custom_call.1} parent=1 // loop_pre_header
      _
    $region3: #{tpu_custom_call.1} parent=1 // loop_header
      %s16 = sphi 0, %s20
      %p17 = scmp.ge.s32.totalorder %s16, 4
      %s26 = sphi 0, %s28
      %s29 = sphi 0, %s26
      %s30 = sphi 0, %s29
      %s46 = sphi 0, %s30
      %s50 = sphi 0, %s50
      %s52 = sphi 0, %s50
      %s53 = sphi 0, %s52
      %s67 = sphi 0, %s53
      %s71 = sphi 0, %s71
      %s73 = sphi 0, %s71
      %s74 = sphi 0, %s73
      %s88 = sphi 0, %s74
      %s94 = sphi 0, %s96
      %s97 = sphi 0, %s94
      %s98 = sphi 0, %s97
      %s114 = sphi 0, %s98
    $region4: #{tpu_custom_call.1} parent=1 // loop_header_branch
      %19 = sbr.rel (%p17) target = $region8
    $region5: #{tpu_custom_call.1} parent=1 // loop_body
      %s21 = ssub.s32 %s16, 1
      %s22 = ssub.s32 %s16, 2
      %s23 = sadd.s32 %s16, 1
      %s24 = ssub.s32 %s16, %s23
      %p25 = scmp.eq.s32.totalorder %s24, 0
      %s27 = sadd.s32 %s26, 1
      %s28 = scalar_select %p25, %s26, %s27
      %p31 = pneg %p25
      %p32 = scmp.eq.s32.totalorder %s16, 1
      %p33 = por %p31, %p32
      %p34 = scmp.ne.s32.totalorder %s26, %s29
      %p35 = scmp.eq.s32.totalorder %s16, 0
      %p36 = por %p34, %p35
      %p37 = scmp.ne.s32.totalorder %s26, %s29
      %p38 = scmp.eq.s32.totalorder %s21, 1
      %p39 = por %p37, %p38
      %p40 = scmp.ne.s32.totalorder %s29, %s30
      %p41 = scmp.eq.s32.totalorder %s21, 0
      %p42 = por %p40, %p41
      %p43 = scmp.ne.s32.totalorder %s29, %s30
      %p44 = scmp.eq.s32.totalorder %s22, 1
      %p45 = por %p43, %p44
      %p47 = scmp.ne.s32.totalorder %s30, %s46
      %p48 = scmp.eq.s32.totalorder %s22, 0
      %p49 = por %p47, %p48
      %s51 = sadd.s32 %s50, 1
      %p54 = scmp.eq.s32.totalorder %s16, 1
      %p55 = scmp.ne.s32.totalorder %s50, %s52
      %p56 = scmp.eq.s32.totalorder %s16, 0
      %p57 = por %p55, %p56
      %p58 = scmp.ne.s32.totalorder %s50, %s52
      %p59 = scmp.eq.s32.totalorder %s21, 1
      %p60 = por %p58, %p59
      %p61 = scmp.ne.s32.totalorder %s52, %s53
      %p62 = scmp.eq.s32.totalorder %s21, 0
      %p63 = por %p61, %p62
      %p64 = scmp.ne.s32.totalorder %s52, %s53
      %p65 = scmp.eq.s32.totalorder %s22, 1
      %p66 = por %p64, %p65
      %p68 = scmp.ne.s32.totalorder %s53, %s67
      %p69 = scmp.eq.s32.totalorder %s22, 0
      %p70 = por %p68, %p69
      %s72 = sadd.s32 %s71, 1
      %p75 = scmp.eq.s32.totalorder %s16, 1
      %p76 = scmp.ne.s32.totalorder %s71, %s73
      %p77 = scmp.eq.s32.totalorder %s16, 0
      %p78 = por %p76, %p77
      %p79 = scmp.ne.s32.totalorder %s71, %s73
      %p80 = scmp.eq.s32.totalorder %s21, 1
      %p81 = por %p79, %p80
      %p82 = scmp.ne.s32.totalorder %s73, %s74
      %p83 = scmp.eq.s32.totalorder %s21, 0
      %p84 = por %p82, %p83
      %p85 = scmp.ne.s32.totalorder %s73, %s74
      %p86 = scmp.eq.s32.totalorder %s22, 1
      %p87 = por %p85, %p86
      %p89 = scmp.ne.s32.totalorder %s74, %s88
      %p90 = scmp.eq.s32.totalorder %s22, 0
      %p91 = por %p89, %p90
      %s92 = ssub.s32 %s16, %s23
      %p93 = scmp.eq.s32.totalorder %s92, 0
      %s95 = sadd.s32 %s94, 1
      %s96 = scalar_select %p93, %s94, %s95
      %p99 = pneg %p93
      %p100 = scmp.eq.s32.totalorder %s16, 1
      %p101 = por %p99, %p100
      %p102 = scmp.ne.s32.totalorder %s94, %s97
      %p103 = scmp.eq.s32.totalorder %s16, 0
      %p104 = por %p102, %p103
      %p105 = scmp.ne.s32.totalorder %s94, %s97
      %p106 = scmp.eq.s32.totalorder %s21, 1
      %p107 = por %p105, %p106
      %p108 = scmp.ne.s32.totalorder %s97, %s98
      %p109 = scmp.eq.s32.totalorder %s21, 0
      %p110 = por %p108, %p109
      %p111 = scmp.ne.s32.totalorder %s97, %s98
      %p112 = scmp.eq.s32.totalorder %s22, 1
      %p113 = por %p111, %p112
      %p115 = scmp.ne.s32.totalorder %s98, %s114
      %p116 = scmp.eq.s32.totalorder %s22, 0
      %p117 = por %p115, %p116
      %p118 = scmp.le.s32.totalorder 1, %s16
      %p119 = scmp.lt.s32.totalorder %s16, 3
      %p120 = pnand %p118, %p119
      %p121 = pneg %p120
      // Predicated region
      $region9: #{tpu_custom_call.1} parent=5 // pred_check
        _
      $region10: #{tpu_custom_call.1} parent=5 // pred_check_branch
        %123 = sbr.rel (%p120) target = $region12
      $region11: #{tpu_custom_call.1} parent=5 // pred_region
        %s124 = ssub.s32 %s16, 1
        // Predicated region
        $region13: #{tpu_custom_call.1} parent=11 // pred_check
          %p125 = pneg %p63
        $region14: #{tpu_custom_call.1} parent=11 // pred_check_branch
          %127 = sbr.rel (%p125) target = $region16
        $region15: #{tpu_custom_call.1} parent=11 // pred_region
          %s129 = ssub.s32 256, 256
          %130 = vsyncadd [#allocation6], %s129
          %s131 = sshll.u32 [#allocation5], 4
          %s132 = int_to_ptr.vmem [resolvable:$true] %s131
          %137 = dma.hbm_to_vmem [thread:$0]  %s1, 256, %s132, [#allocation6], 64, 64, 4
        $region16: #{tpu_custom_call.1} parent=11 // pred_fallthru
          _
        // Predicated region
        $region17: #{tpu_custom_call.1} parent=11 // pred_check
          %p138 = pneg %p84
        $region18: #{tpu_custom_call.1} parent=11 // pred_check_branch
          %140 = sbr.rel (%p138) target = $region20
        $region19: #{tpu_custom_call.1} parent=11 // pred_region
          _
        $region20: #{tpu_custom_call.1} parent=11 // pred_fallthru
          _
      $region12: #{tpu_custom_call.1} parent=5 // pred_fallthru
        _
      %p141 = scmp.lt.s32.totalorder %s16, 2
      // Predicated region
      $region21: #{tpu_custom_call.1} parent=5 // pred_check
        %p142 = pneg %p141
      $region22: #{tpu_custom_call.1} parent=5 // pred_check_branch
        %144 = sbr.rel (%p142) target = $region24
      $region23: #{tpu_custom_call.1} parent=5 // pred_region
        // Predicated region
        $region25: #{tpu_custom_call.1} parent=23 // pred_check
          %p145 = pneg %p36
        $region26: #{tpu_custom_call.1} parent=23 // pred_check_branch
          %147 = sbr.rel (%p145) target = $region28
        $region27: #{tpu_custom_call.1} parent=23 // pred_region
          %s148 = sand.u32 %s26, 1
          %s149 = scalar_lea.sflag [#allocation3], %s148
          %s150 = sand.u32 %s26, 1
          %s151 = smul.addr %s150, 8
          %s152 = scalar_lea.vmem [#allocation2], %s151
          %s154 = ssub.s32 128, 128
          %155 = vsyncadd %s149, %s154
          %s156 = smul.addr %s16, 128
          %s157 = scalar_lea.hbm %s0, %s156
          %s159 = sshll.u32 %s152, 4
          %s160 = int_to_ptr.vmem [resolvable:$true] %s159
          %162 = dma.hbm_to_vmem [thread:$0]  %s157, 128, %s160, %s149
        $region28: #{tpu_custom_call.1} parent=23 // pred_fallthru
          _
      $region24: #{tpu_custom_call.1} parent=5 // pred_fallthru
        _
      %p163 = scmp.le.s32.totalorder 1, %s16
      %p164 = scmp.lt.s32.totalorder %s16, 3
      %p165 = pnand %p163, %p164
      %p166 = pneg %p165
      // Predicated region
      $region29: #{tpu_custom_call.1} parent=5 // pred_check
        _
      $region30: #{tpu_custom_call.1} parent=5 // pred_check_branch
        %168 = sbr.rel (%p165) target = $region32
      $region31: #{tpu_custom_call.1} parent=5 // pred_region
        %s169 = ssub.s32 %s16, 1
        %s170 = sand.u32 %s29, 1
        %s171 = scalar_lea.sflag [#allocation3], %s170
        %s172 = sand.u32 %s29, 1
        %s173 = smul.addr %s172, 8
        %s174 = scalar_lea.vmem [#allocation2], %s173
        // Predicated region
        $region33: #{tpu_custom_call.1} parent=31 // pred_check
          %p175 = pneg %p42
        $region34: #{tpu_custom_call.1} parent=31 // pred_check_branch
          %177 = sbr.rel (%p175) target = $region36
        $region35: #{tpu_custom_call.1} parent=31 // pred_region
          %178 = dma.done %s171, 128
        $region36: #{tpu_custom_call.1} parent=31 // pred_fallthru
          _
        // Predicated region
        $region37: #{tpu_custom_call.1} parent=31 // pred_check
          %p179 = pneg %p63
        $region38: #{tpu_custom_call.1} parent=31 // pred_check_branch
          %181 = sbr.rel (%p179) target = $region40
        $region39: #{tpu_custom_call.1} parent=31 // pred_region
          %182 = dma.done [#allocation6], 256
        $region40: #{tpu_custom_call.1} parent=31 // pred_fallthru
          _
        %s183 = sand.u32 %s29, 1
        %s184 = scalar_lea.sflag [#allocation3], %s183
        %s185 = sand.u32 %s29, 1
        %s186 = smul.addr %s185, 8
        %s187 = scalar_lea.vmem [#allocation2], %s186
        %p188 = pneg %p42
        %p189 = pneg %p39
        %p190 = pneg %p63
        %p191 = pneg %p60
        %p192 = pneg %p84
        %p193 = pneg %p81
        %p194 = pneg %p110
        %p195 = pneg %p107
        %s196 = sand.u32 %s97, 1
        %s197 = scalar_lea.sflag [#allocation4], %s196
        %s198 = sand.u32 %s97, 1
        %s199 = smul.addr %s198, 8
        %s200 = scalar_lea.vmem [#allocation7], %s199
        %v202 = vld [vmem:[%s174] sm:$0xff]
        %v203 = vpack.c.bf16 %v202, %v202
        %v204 = vld [vmem:[#allocation5] sm:$0xf]
        %v205 = vld [vmem:[#allocation5 + $0x4] sm:$0xf]
        %v206 = vld [vmem:[#allocation5 + $0x8] sm:$0xf]
        %v207 = vld [vmem:[#allocation5 + $0xc] sm:$0xf]
        %v208 = vld [vmem:[%s2] sm:$0x1]
        %v210 = vlaneseq
        %v211 = vshrl.u32 %v210, 7
        %v212 = vsub.s32 0, %v211
        %v213 = vrot.slane %v208, %v212
        %v219 = vunpack.c.l.b16 %v204
        %v220 = vunpack.c.l.b16 %v205
        %v221 = vunpack.c.l.b16 %v206
        %v222 = vunpack.c.l.b16 %v207
        %v223 = vpack.c.b16 %v220, %v219
        %v224 = vpack.c.b16 %v222, %v221
        %vm227 = vcmask 261120
        %v229 = vsel %vm227, %v203, 0
        %231 = vmatprep.subr.bf16.mxu0 0
        %232 = vmatpush1.bf16.msra.mxu0 %v223
        %233 = vmatprep.subr.bf16.mxu0 0
        %234 = vmatpush1.bf16.msra.mxu0 %v224
        %235 = vmatprep.subr.bf16.mxu0 0
        %236 = vmatpush1.bf16.msra.mxu0 0
        %237 = vmatprep.subr.bf16.mxu0 0
        %238 = vmatpush1.bf16.msra.mxu0 0
        %239 = vmatprep.subr.bf16.mxu0 0
        %240 = vmatpush1.bf16.msra.mxu0 0
        %241 = vmatprep.subr.bf16.mxu0 0
        %242 = vmatpush1.bf16.msra.mxu0 0
        %243 = vmatprep.subr.bf16.mxu0 0
        %244 = vmatpush1.bf16.msra.mxu0 0
        %245 = vmatprep.subr.bf16.mxu0 0
        %246 = vmatpush1.bf16.msra.mxu0 0
        %247 = vmatprep.subr.bf16.mxu0 0
        %248 = vmatpush1.bf16.msra.mxu0 0
        %249 = vmatprep.subr.bf16.mxu0 0
        %250 = vmatpush1.bf16.msra.mxu0 0
        %251 = vmatprep.subr.bf16.mxu0 0
        %252 = vmatpush1.bf16.msra.mxu0 0
        %253 = vmatprep.subr.bf16.mxu0 0
        %254 = vmatpush1.bf16.msra.mxu0 0
        %255 = vmatprep.subr.bf16.mxu0 0
        %256 = vmatpush1.bf16.msra.mxu0 0
        %257 = vmatprep.subr.bf16.mxu0 0
        %258 = vmatpush1.bf16.msra.mxu0 0
        %259 = vmatprep.subr.bf16.mxu0 0
        %260 = vmatpush1.bf16.msra.mxu0 0
        %261 = vmatprep.subr.bf16.mxu0 0
        %262 = vmatpush1.bf16.msra.mxu0 0
        %263 = vmatprep.mubr.bf16.mxu0 0
        %264 = vmatmul.mubr.bf16.gmra.mrb[0].mxu0 %v229
        %v265 = vpop.f32.mrb[0].mxu0
        %v266 = vadd.f32 %v213, %v265
        %v267 = vpop.f32.mrb[0].mxu0
        %v268 = vpop.f32.mrb[0].mxu0
        %v269 = vpop.f32.mrb[0].mxu0
        %270 = vdwg.mxu0
        %271 = vmax.xlane.f32.xlu0 %v266
        %v272 = vpop.xlane.xlu0 %271
        %v273 = vsub.f32 %v266, %v272
        %274 = vst [vmem:[%s200] sm:$0xff] %v273
        %v275 = vld [vmem:[%s200] sm:$0xff]
        %v276 = vpack.c.bf16 %v275, %v275
        %v278 = vmul.bf16 %v276, 1069105081
        %v279 = vpow.bf16.pop %v278
        %v280 = vunpack.c.l.bf16 %v279
        %281 = vadd.xlane.f32.xlu0 %v280
        %v282 = vpop.xlane.xlu0 %281
        %v283 = vlog2.pop %v282
        %v284 = vmul.f32 %v283, 0.6931472
        %v285 = vsub.f32 %v275, %v284
        %286 = vst [vmem:[%s200] sm:$0xff] %v285
        %s287 = sand.u32 %s97, 1
        %s288 = scalar_lea.sflag [#allocation4], %s287
        %s289 = sand.u32 %s97, 1
        %s290 = smul.addr %s289, 8
        %s291 = scalar_lea.vmem [#allocation7], %s290
        // Predicated region
        $region41: #{tpu_custom_call.1} parent=31 // pred_check
          %p292 = pneg %p107
        $region42: #{tpu_custom_call.1} parent=31 // pred_check_branch
          %294 = sbr.rel (%p292) target = $region44
        $region43: #{tpu_custom_call.1} parent=31 // pred_region
          %s296 = ssub.s32 128, 128
          %297 = vsyncadd %s288, %s296
          %s298 = smul.addr %s21, 128
          %s299 = scalar_lea.hbm %s3, %s298
          %s301 = sshll.u32 %s291, 4
          %s302 = int_to_ptr.vmem [resolvable:$true] %s301
          %304 = dma.vmem_to_hbm [thread:$0]  %s302, 128, %s299, %s288
        $region44: #{tpu_custom_call.1} parent=31 // pred_fallthru
          _
      $region32: #{tpu_custom_call.1} parent=5 // pred_fallthru
        _
      %p305 = scmp.le.s32.totalorder 2, %s16
      // Predicated region
      $region45: #{tpu_custom_call.1} parent=5 // pred_check
        %p306 = pneg %p305
      $region46: #{tpu_custom_call.1} parent=5 // pred_check_branch
        %308 = sbr.rel (%p306) target = $region48
      $region47: #{tpu_custom_call.1} parent=5 // pred_region
        %s309 = ssub.s32 %s16, 2
        // Predicated region
        $region49: #{tpu_custom_call.1} parent=47 // pred_check
          %p310 = pneg %p113
        $region50: #{tpu_custom_call.1} parent=47 // pred_check_branch
          %312 = sbr.rel (%p310) target = $region52
        $region51: #{tpu_custom_call.1} parent=47 // pred_region
          %s313 = sand.u32 %s98, 1
          %s314 = scalar_lea.sflag [#allocation4], %s313
          %s315 = sand.u32 %s98, 1
          %s316 = smul.addr %s315, 8
          %s317 = scalar_lea.vmem [#allocation7], %s316
          %318 = dma.done %s314, 128
        $region52: #{tpu_custom_call.1} parent=47 // pred_fallthru
          _
      $region48: #{tpu_custom_call.1} parent=5 // pred_fallthru
        _
    $region6: #{tpu_custom_call.1} parent=1 // loop_footer
      %s20 = sadd.s32 1, %s16
    $region7: #{tpu_custom_call.1} parent=1 // loop_footer_branch
      %15 = sbr.rel target = $region3
    $region8: #{tpu_custom_call.1} parent=1 // loop_exit
      _
    %319 = vsyncpa [#allocation3], 1
    %s320 = scalar_lea.sflag [#allocation3], 1
    %321 = vsyncpa %s320, 1
    %322 = vsyncpa [#allocation6], 1
    %323 = vsyncpa [#allocation4], 1
    %s324 = scalar_lea.sflag [#allocation4], 1
    %325 = vsyncpa %s324, 1

</llo_original>
